<compile_context>
chip_gen: v6e
topology: v6e:2x2x1
jax: 0.10.0
libtpu: 0.0.40
codegen_flags: <defaults>
</compile_context>

<pallas_src>
import jax
import jax.numpy as jnp
from jax.experimental import pallas as pl
from jax.experimental.pallas import tpu as pltpu

LANES = 128


# ----------------------------------------------------------------------------
# Parameter packing: one (rows, 128) f32 slab; each section zero-padded to 128
# lanes and its row count rounded to a multiple of 8 (sublane-aligned starts).
# ----------------------------------------------------------------------------
def _pack_params(params):
    chunks, offsets, row = [], [], 0
    for p in params:
        p = jnp.asarray(p, jnp.float32)
        r, c = p.shape
        rp = ((r + 7) // 8) * 8
        chunks.append(jnp.pad(p, ((0, rp - r), (0, LANES - c))))
        offsets.append((row, r, c))          # (row_start, rows, cols) - static
        row += rp
    return jnp.concatenate(chunks, axis=0), tuple(offsets)


# ----------------------------------------------------------------------------
# Fused kernel: 3x GraphConv (relu(A @ (h @ W) + b)) + flatten + fc1/relu +
# fc2 + sigmoid, one grid step over the whole (tiny) batch.
# ----------------------------------------------------------------------------
def _make_kernel(B, N, offsets, out_size):
    def kernel(x_ref, a_ref, p_ref, o_ref):
        def sec(i):
            r0, r, c = offsets[i]
            return p_ref[r0:r0 + r, 0:c]     # static slice of the param slab

        a = a_ref[...]                        # (B*N, B*N) block-diag adjacency
        h = x_ref[...]                        # (B*N, F_in)

        # --- 3x GraphConv, PyTorch order: relu(A @ (h @ W) + b) -------------
        for li in range(3):
            w = sec(2 * li)                   # (F_in, F_out)
            b = sec(2 * li + 1)               # (1, F_out)
            hw = jnp.dot(h, w, preferred_element_type=jnp.float32)
            h = jnp.maximum(
                jnp.dot(a, hw, preferred_element_type=jnp.float32) + b, 0.0)

        # TODO(synk): F.dropout is identity in eval mode; training-mode
        # dropout (pltpu.prng_* masking) is not implemented here.

        # --- classifier head -------------------------------------------------
        # torch's .view(-1, N*OUT) flatten is folded by contracting each node's
        # features against the matching fw1 row block; the 8 per-node dots are
        # independent and combined with a pairwise tree reduction.
        h3 = h.reshape(B, N, out_size)        # (B, N, OUT)
        fw1_row0, _, pad = offsets[6]
        parts = [
            jnp.dot(h3[:, n, :],
                    p_ref[fw1_row0 + n * out_size:
                          fw1_row0 + (n + 1) * out_size, 0:pad],
                    preferred_element_type=jnp.float32)
            for n in range(N)
        ]
        while len(parts) > 1:
            nxt = [parts[i] + parts[i + 1] for i in range(0, len(parts) - 1, 2)]
            if len(parts) % 2:
                nxt.append(parts[-1])
            parts = nxt

        z = jnp.maximum(parts[0] + sec(7), 0.0)                     # (B, PAD)
        y = jnp.dot(z, sec(8), preferred_element_type=jnp.float32) + sec(9)
        o_ref[...] = jax.nn.sigmoid(y)                              # (B, CLS)

    return kernel


def gcn_forward(X, A, params):
    B, N, F_in = X.shape
    w1, b1, w2, b2, w3, b3, fw1, fb1, fw2, fb2 = params
    OUT = w3.shape[1]
    CLS = fw2.shape[1]

    # One parameter slab, one DMA.
    slab, offsets = _pack_params(
        (w1, b1, w2, b2, w3, b3, fw1, fb1, fw2, fb2))
    R = slab.shape[0]

    # 2D activations + block-diagonal adjacency (exact: off-block entries are 0).
    X2d = X.reshape(B * N, F_in).astype(jnp.float32)
    A_bd = (jnp.eye(B, dtype=jnp.float32)[:, None, :, None]
            * A.astype(jnp.float32)[:, :, None, :]).reshape(B * N, B * N)

    kernel = _make_kernel(B, N, offsets, OUT)

    def full(shape):
        zeros = (0,) * len(shape)
        return pl.BlockSpec(shape, lambda i: zeros)

    return pl.pallas_call(
        kernel,
        out_shape=jax.ShapeDtypeStruct((B, CLS), jnp.float32),
        grid=(1,),
        in_specs=[
            full((B * N, F_in)),      # X (flattened)
            full((B * N, B * N)),     # block-diag A
            full((R, LANES)),         # packed parameter slab
        ],
        out_specs=full((B, CLS)),
        compiler_params=pltpu.CompilerParams(
            dimension_semantics=("arbitrary",)),
    )(X2d, A_bd, slab)


# ----------------------------------------------------------------------------
# Pure-JAX reference matching the PyTorch module (eval mode).
# ----------------------------------------------------------------------------
def reference_forward(X, A, params):
    w1, b1, w2, b2, w3, b3, fw1, fb1, fw2, fb2 = params

    def conv(h, w, b):
        return jax.nn.relu(jnp.einsum("bij,bjk->bik", A, h @ w) + b[0])

    h = conv(X, w1, b1)
    h = conv(h, w2, b2)
    h = conv(h, w3, b3)
    flat = h.reshape(h.shape[0], -1)
    z = jax.nn.relu(flat @ fw1 + fb1[0])
    return jax.nn.sigmoid(z @ fw2 + fb2[0])


if __name__ == "__main__":
    # Hyperparameters implied by the module
    padding_size = 8        # N (number of graph nodes)
    input_size = 16
    hidden_size = 32
    output_size = 16
    class_num = 4
    batch = 2

    key = jax.random.PRNGKey(0)
    keys = jax.random.split(key, 12)

    # Deterministic parameter init (synthetic; PyTorch leaves GraphConv params
    # uninitialized, so any deterministic init is acceptable).
    def init(k, shape, scale=0.1):
        return (scale * jax.random.normal(k, shape)).astype(jnp.float32)

    w1 = init(keys[0], (input_size, hidden_size))
    b1 = init(keys[1], (1, hidden_size))
    w2 = init(keys[2], (hidden_size, hidden_size * 2))
    b2 = init(keys[3], (1, hidden_size * 2))
    w3 = init(keys[4], (hidden_size * 2, output_size))
    b3 = init(keys[5], (1, output_size))
    # nn.Linear weights stored pre-transposed as (in_features, out_features)
    fw1 = init(keys[6], (output_size * padding_size, padding_size))
    fb1 = init(keys[7], (1, padding_size))
    fw2 = init(keys[8], (padding_size, class_num))
    fb2 = init(keys[9], (1, class_num))
    params = (w1, b1, w2, b2, w3, b3, fw1, fb1, fw2, fb2)

    X = init(keys[10], (batch, padding_size, input_size), scale=1.0)
    A = init(keys[11], (batch, padding_size, padding_size), scale=1.0)

    out = gcn_forward(X, A, params)
    out = jax.block_until_ready(out)

    ref = reference_forward(X, A, params)
    assert out.shape == (batch, class_num)
    assert jnp.allclose(out, ref, rtol=1e-5, atol=1e-5), "mismatch vs reference"

    print("KERNEL_OK")
</pallas_src>

<mosaic_0001>
module attributes {stable_mosaic.version = 11 : i64} {
  func.func @kernel(%arg0: i32, %arg1: memref<16x16xf32, #tpu.memory_space<vmem>>, %arg2: memref<16x16xf32, #tpu.memory_space<vmem>>, %arg3: memref<288x128xf32, #tpu.memory_space<vmem>>, %arg4: memref<2x4xf32, #tpu.memory_space<vmem>>) attributes {dimension_semantics = [#tpu.dimension_semantics<arbitrary>], iteration_bounds = array<i64: 1>, scalar_prefetch = 0 : i64, scratch_operands = 0 : i64, tpu.core_type = #tpu.core_type<tc>, window_params = [{pipeline_mode = #tpu.pipeline_mode<synchronous>, transform_indices = @transform_0, window_bounds = array<i64: 16, 16>}, {pipeline_mode = #tpu.pipeline_mode<synchronous>, transform_indices = @transform_1, window_bounds = array<i64: 16, 16>}, {pipeline_mode = #tpu.pipeline_mode<synchronous>, transform_indices = @transform_2, window_bounds = array<i64: 288, 128>}, {pipeline_mode = #tpu.pipeline_mode<synchronous>, transform_indices = @transform_3, window_bounds = array<i64: 2, 4>}]} {
    %c0 = arith.constant 0 : index
    %c0_0 = arith.constant 0 : index
    %0 = vector.load %arg2[%c0, %c0_0] : memref<16x16xf32, #tpu.memory_space<vmem>>, vector<16x16xf32>
    %c0_1 = arith.constant 0 : index
    %c0_2 = arith.constant 0 : index
    %1 = vector.load %arg1[%c0_1, %c0_2] : memref<16x16xf32, #tpu.memory_space<vmem>>, vector<16x16xf32>
    %c0_3 = arith.constant 0 : index
    %c0_4 = arith.constant 0 : index
    %2 = vector.load %arg3[%c0_3, %c0_4] : memref<288x128xf32, #tpu.memory_space<vmem>>, vector<16x32xf32>
    %c16 = arith.constant 16 : index
    %c0_5 = arith.constant 0 : index
    %3 = vector.load %arg3[%c16, %c0_5] : memref<288x128xf32, #tpu.memory_space<vmem>>, vector<1x32xf32>
    %cst = arith.constant dense<0.000000e+00> : vector<16x32xf32>
    %4 = tpu.matmul %1, %2, %cst {dimension_numbers = #tpu.dot_dimension_numbers<[1], [0], [0], [1], [0, 0, 1, 1], [], []>} : vector<16x16xf32>, vector<16x32xf32>, vector<16x32xf32> -> vector<16x32xf32>
    %cst_6 = arith.constant dense<0.000000e+00> : vector<16x32xf32>
    %5 = tpu.matmul %0, %4, %cst_6 {dimension_numbers = #tpu.dot_dimension_numbers<[1], [0], [0], [1], [0, 0, 1, 1], [], []>} : vector<16x16xf32>, vector<16x32xf32>, vector<16x32xf32> -> vector<16x32xf32>
    %6 = vector.broadcast %3 : vector<1x32xf32> to vector<16x32xf32>
    %7 = arith.addf %5, %6 : vector<16x32xf32>
    %cst_7 = arith.constant 0.000000e+00 : f32
    %8 = vector.broadcast %cst_7 : f32 to vector<16x32xf32>
    %9 = arith.maximumf %7, %8 : vector<16x32xf32>
    %c24 = arith.constant 24 : index
    %c0_8 = arith.constant 0 : index
    %10 = vector.load %arg3[%c24, %c0_8] : memref<288x128xf32, #tpu.memory_space<vmem>>, vector<32x64xf32>
    %c56 = arith.constant 56 : index
    %c0_9 = arith.constant 0 : index
    %11 = vector.load %arg3[%c56, %c0_9] : memref<288x128xf32, #tpu.memory_space<vmem>>, vector<1x64xf32>
    %cst_10 = arith.constant dense<0.000000e+00> : vector<16x64xf32>
    %12 = tpu.matmul %9, %10, %cst_10 {dimension_numbers = #tpu.dot_dimension_numbers<[1], [0], [0], [1], [0, 0, 1, 1], [], []>} : vector<16x32xf32>, vector<32x64xf32>, vector<16x64xf32> -> vector<16x64xf32>
    %cst_11 = arith.constant dense<0.000000e+00> : vector<16x64xf32>
    %13 = tpu.matmul %0, %12, %cst_11 {dimension_numbers = #tpu.dot_dimension_numbers<[1], [0], [0], [1], [0, 0, 1, 1], [], []>} : vector<16x16xf32>, vector<16x64xf32>, vector<16x64xf32> -> vector<16x64xf32>
    %14 = vector.broadcast %11 : vector<1x64xf32> to vector<16x64xf32>
    %15 = arith.addf %13, %14 : vector<16x64xf32>
    %cst_12 = arith.constant 0.000000e+00 : f32
    %16 = vector.broadcast %cst_12 : f32 to vector<16x64xf32>
    %17 = arith.maximumf %15, %16 : vector<16x64xf32>
    %c64 = arith.constant 64 : index
    %c0_13 = arith.constant 0 : index
    %18 = vector.load %arg3[%c64, %c0_13] : memref<288x128xf32, #tpu.memory_space<vmem>>, vector<64x16xf32>
    %c128 = arith.constant 128 : index
    %c0_14 = arith.constant 0 : index
    %19 = vector.load %arg3[%c128, %c0_14] : memref<288x128xf32, #tpu.memory_space<vmem>>, vector<1x16xf32>
    %cst_15 = arith.constant dense<0.000000e+00> : vector<16x16xf32>
    %20 = tpu.matmul %17, %18, %cst_15 {dimension_numbers = #tpu.dot_dimension_numbers<[1], [0], [0], [1], [0, 0, 1, 1], [], []>} : vector<16x64xf32>, vector<64x16xf32>, vector<16x16xf32> -> vector<16x16xf32>
    %cst_16 = arith.constant dense<0.000000e+00> : vector<16x16xf32>
    %21 = tpu.matmul %0, %20, %cst_16 {dimension_numbers = #tpu.dot_dimension_numbers<[1], [0], [0], [1], [0, 0, 1, 1], [], []>} : vector<16x16xf32>, vector<16x16xf32>, vector<16x16xf32> -> vector<16x16xf32>
    %22 = vector.broadcast %19 : vector<1x16xf32> to vector<16x16xf32>
    %23 = arith.addf %21, %22 : vector<16x16xf32>
    %cst_17 = arith.constant 0.000000e+00 : f32
    %24 = vector.broadcast %cst_17 : f32 to vector<16x16xf32>
    %25 = arith.maximumf %23, %24 : vector<16x16xf32>
    %26 = vector.shape_cast %25 : vector<16x16xf32> to vector<2x8x16xf32>
    %27 = vector.extract_strided_slice %26 {offsets = [0, 0, 0], sizes = [2, 1, 16], strides = [1, 1, 1]} : vector<2x8x16xf32> to vector<2x1x16xf32>
    %28 = vector.shape_cast %27 : vector<2x1x16xf32> to vector<2x16xf32>
    %c136 = arith.constant 136 : index
    %c0_18 = arith.constant 0 : index
    %29 = vector.load %arg3[%c136, %c0_18] : memref<288x128xf32, #tpu.memory_space<vmem>>, vector<16x8xf32>
    %cst_19 = arith.constant dense<0.000000e+00> : vector<2x8xf32>
    %30 = tpu.matmul %28, %29, %cst_19 {dimension_numbers = #tpu.dot_dimension_numbers<[1], [0], [0], [1], [0, 0, 1, 1], [], []>} : vector<2x16xf32>, vector<16x8xf32>, vector<2x8xf32> -> vector<2x8xf32>
    %31 = vector.extract_strided_slice %26 {offsets = [0, 1, 0], sizes = [2, 1, 16], strides = [1, 1, 1]} : vector<2x8x16xf32> to vector<2x1x16xf32>
    %32 = vector.shape_cast %31 : vector<2x1x16xf32> to vector<2x16xf32>
    %c152 = arith.constant 152 : index
    %c0_20 = arith.constant 0 : index
    %33 = vector.load %arg3[%c152, %c0_20] : memref<288x128xf32, #tpu.memory_space<vmem>>, vector<16x8xf32>
    %cst_21 = arith.constant dense<0.000000e+00> : vector<2x8xf32>
    %34 = tpu.matmul %32, %33, %cst_21 {dimension_numbers = #tpu.dot_dimension_numbers<[1], [0], [0], [1], [0, 0, 1, 1], [], []>} : vector<2x16xf32>, vector<16x8xf32>, vector<2x8xf32> -> vector<2x8xf32>
    %35 = vector.extract_strided_slice %26 {offsets = [0, 2, 0], sizes = [2, 1, 16], strides = [1, 1, 1]} : vector<2x8x16xf32> to vector<2x1x16xf32>
    %36 = vector.shape_cast %35 : vector<2x1x16xf32> to vector<2x16xf32>
    %c168 = arith.constant 168 : index
    %c0_22 = arith.constant 0 : index
    %37 = vector.load %arg3[%c168, %c0_22] : memref<288x128xf32, #tpu.memory_space<vmem>>, vector<16x8xf32>
    %cst_23 = arith.constant dense<0.000000e+00> : vector<2x8xf32>
    %38 = tpu.matmul %36, %37, %cst_23 {dimension_numbers = #tpu.dot_dimension_numbers<[1], [0], [0], [1], [0, 0, 1, 1], [], []>} : vector<2x16xf32>, vector<16x8xf32>, vector<2x8xf32> -> vector<2x8xf32>
    %39 = vector.extract_strided_slice %26 {offsets = [0, 3, 0], sizes = [2, 1, 16], strides = [1, 1, 1]} : vector<2x8x16xf32> to vector<2x1x16xf32>
    %40 = vector.shape_cast %39 : vector<2x1x16xf32> to vector<2x16xf32>
    %c184 = arith.constant 184 : index
    %c0_24 = arith.constant 0 : index
    %41 = vector.load %arg3[%c184, %c0_24] : memref<288x128xf32, #tpu.memory_space<vmem>>, vector<16x8xf32>
    %cst_25 = arith.constant dense<0.000000e+00> : vector<2x8xf32>
    %42 = tpu.matmul %40, %41, %cst_25 {dimension_numbers = #tpu.dot_dimension_numbers<[1], [0], [0], [1], [0, 0, 1, 1], [], []>} : vector<2x16xf32>, vector<16x8xf32>, vector<2x8xf32> -> vector<2x8xf32>
    %43 = vector.extract_strided_slice %26 {offsets = [0, 4, 0], sizes = [2, 1, 16], strides = [1, 1, 1]} : vector<2x8x16xf32> to vector<2x1x16xf32>
    %44 = vector.shape_cast %43 : vector<2x1x16xf32> to vector<2x16xf32>
    %c200 = arith.constant 200 : index
    %c0_26 = arith.constant 0 : index
    %45 = vector.load %arg3[%c200, %c0_26] : memref<288x128xf32, #tpu.memory_space<vmem>>, vector<16x8xf32>
    %cst_27 = arith.constant dense<0.000000e+00> : vector<2x8xf32>
    %46 = tpu.matmul %44, %45, %cst_27 {dimension_numbers = #tpu.dot_dimension_numbers<[1], [0], [0], [1], [0, 0, 1, 1], [], []>} : vector<2x16xf32>, vector<16x8xf32>, vector<2x8xf32> -> vector<2x8xf32>
    %47 = vector.extract_strided_slice %26 {offsets = [0, 5, 0], sizes = [2, 1, 16], strides = [1, 1, 1]} : vector<2x8x16xf32> to vector<2x1x16xf32>
    %48 = vector.shape_cast %47 : vector<2x1x16xf32> to vector<2x16xf32>
    %c216 = arith.constant 216 : index
    %c0_28 = arith.constant 0 : index
    %49 = vector.load %arg3[%c216, %c0_28] : memref<288x128xf32, #tpu.memory_space<vmem>>, vector<16x8xf32>
    %cst_29 = arith.constant dense<0.000000e+00> : vector<2x8xf32>
    %50 = tpu.matmul %48, %49, %cst_29 {dimension_numbers = #tpu.dot_dimension_numbers<[1], [0], [0], [1], [0, 0, 1, 1], [], []>} : vector<2x16xf32>, vector<16x8xf32>, vector<2x8xf32> -> vector<2x8xf32>
    %51 = vector.extract_strided_slice %26 {offsets = [0, 6, 0], sizes = [2, 1, 16], strides = [1, 1, 1]} : vector<2x8x16xf32> to vector<2x1x16xf32>
    %52 = vector.shape_cast %51 : vector<2x1x16xf32> to vector<2x16xf32>
    %c232 = arith.constant 232 : index
    %c0_30 = arith.constant 0 : index
    %53 = vector.load %arg3[%c232, %c0_30] : memref<288x128xf32, #tpu.memory_space<vmem>>, vector<16x8xf32>
    %cst_31 = arith.constant dense<0.000000e+00> : vector<2x8xf32>
    %54 = tpu.matmul %52, %53, %cst_31 {dimension_numbers = #tpu.dot_dimension_numbers<[1], [0], [0], [1], [0, 0, 1, 1], [], []>} : vector<2x16xf32>, vector<16x8xf32>, vector<2x8xf32> -> vector<2x8xf32>
    %55 = vector.extract_strided_slice %26 {offsets = [0, 7, 0], sizes = [2, 1, 16], strides = [1, 1, 1]} : vector<2x8x16xf32> to vector<2x1x16xf32>
    %56 = vector.shape_cast %55 : vector<2x1x16xf32> to vector<2x16xf32>
    %c248 = arith.constant 248 : index
    %c0_32 = arith.constant 0 : index
    %57 = vector.load %arg3[%c248, %c0_32] : memref<288x128xf32, #tpu.memory_space<vmem>>, vector<16x8xf32>
    %cst_33 = arith.constant dense<0.000000e+00> : vector<2x8xf32>
    %58 = tpu.matmul %56, %57, %cst_33 {dimension_numbers = #tpu.dot_dimension_numbers<[1], [0], [0], [1], [0, 0, 1, 1], [], []>} : vector<2x16xf32>, vector<16x8xf32>, vector<2x8xf32> -> vector<2x8xf32>
    %59 = arith.addf %30, %34 : vector<2x8xf32>
    %60 = arith.addf %38, %42 : vector<2x8xf32>
    %61 = arith.addf %46, %50 : vector<2x8xf32>
    %62 = arith.addf %54, %58 : vector<2x8xf32>
    %63 = arith.addf %59, %60 : vector<2x8xf32>
    %64 = arith.addf %61, %62 : vector<2x8xf32>
    %65 = arith.addf %63, %64 : vector<2x8xf32>
    %c264 = arith.constant 264 : index
    %c0_34 = arith.constant 0 : index
    %66 = vector.load %arg3[%c264, %c0_34] : memref<288x128xf32, #tpu.memory_space<vmem>>, vector<1x8xf32>
    %67 = vector.broadcast %66 : vector<1x8xf32> to vector<2x8xf32>
    %68 = arith.addf %65, %67 : vector<2x8xf32>
    %cst_35 = arith.constant 0.000000e+00 : f32
    %69 = vector.broadcast %cst_35 : f32 to vector<2x8xf32>
    %70 = arith.maximumf %68, %69 : vector<2x8xf32>
    %c272 = arith.constant 272 : index
    %c0_36 = arith.constant 0 : index
    %71 = vector.load %arg3[%c272, %c0_36] : memref<288x128xf32, #tpu.memory_space<vmem>>, vector<8x4xf32>
    %cst_37 = arith.constant dense<0.000000e+00> : vector<2x4xf32>
    %72 = tpu.matmul %70, %71, %cst_37 {dimension_numbers = #tpu.dot_dimension_numbers<[1], [0], [0], [1], [0, 0, 1, 1], [], []>} : vector<2x8xf32>, vector<8x4xf32>, vector<2x4xf32> -> vector<2x4xf32>
    %c280 = arith.constant 280 : index
    %c0_38 = arith.constant 0 : index
    %73 = vector.load %arg3[%c280, %c0_38] : memref<288x128xf32, #tpu.memory_space<vmem>>, vector<1x4xf32>
    %74 = vector.broadcast %73 : vector<1x4xf32> to vector<2x4xf32>
    %75 = arith.addf %72, %74 : vector<2x4xf32>
    %76 = arith.negf %75 : vector<2x4xf32>
    %77 = math.exp %76 : vector<2x4xf32>
    %cst_39 = arith.constant 1.000000e+00 : f32
    %78 = vector.broadcast %cst_39 : f32 to vector<2x4xf32>
    %79 = arith.addf %78, %77 : vector<2x4xf32>
    %80 = arith.divf %78, %79 : vector<2x4xf32>
    %c0_40 = arith.constant 0 : index
    %c0_41 = arith.constant 0 : index
    %81 = vector.load %arg4[%c0_40, %c0_41] : memref<2x4xf32, #tpu.memory_space<vmem>>, vector<2x4xf32>
    tpu.vector_store %arg4[%c0_40, %c0_41], %80 {strides = array<i32>} : memref<2x4xf32, #tpu.memory_space<vmem>>, vector<2x4xf32>,
    return
  }
  func.func @transform_0(%arg0: i32) -> (i32, i32) {
    %c0_i32 = arith.constant 0 : i32
    %c0_i32_0 = arith.constant 0 : i32
    %c0_i32_1 = arith.constant 0 : i32
    return %c0_i32, %c0_i32_0 : i32, i32
  }
  func.func @transform_1(%arg0: i32) -> (i32, i32) {
    %c0_i32 = arith.constant 0 : i32
    %c0_i32_0 = arith.constant 0 : i32
    %c0_i32_1 = arith.constant 0 : i32
    return %c0_i32, %c0_i32_0 : i32, i32
  }
  func.func @transform_2(%arg0: i32) -> (i32, i32) {
    %c0_i32 = arith.constant 0 : i32
    %c0_i32_0 = arith.constant 0 : i32
    %c0_i32_1 = arith.constant 0 : i32
    return %c0_i32, %c0_i32_0 : i32, i32
  }
  func.func @transform_3(%arg0: i32) -> (i32, i32) {
    %c0_i32 = arith.constant 0 : i32
    %c0_i32_0 = arith.constant 0 : i32
    %c0_i32_1 = arith.constant 0 : i32
    return %c0_i32, %c0_i32_0 : i32, i32
  }
}

</mosaic_0001>

<llo_original>
// kernel: tpu_custom_call.1
$region0: #{tpu_custom_call.1}
  #allocation0 [shape = 'u32[]', space=smem, size = 0x4, offset = 0x4, fixed_abs, tag = 'smem constant byte address 0x4 - core index']
  #allocation1 [shape = 'u32[144,128]{1,0:T(1,128)}', space=vmem, size = 0x12000, scoped, tag = 'internal scratch']
  %s0 = inlined_call_operand.hbm [shape: f32[16,16], index: 0, kind: input, shape index: {}]
  %s1 = inlined_call_operand.hbm [shape: f32[16,16], index: 1, kind: input, shape index: {}]
  %s2 = inlined_call_operand.hbm [shape: f32[288,128], index: 2, kind: input, shape index: {}]
  %s3 = inlined_call_operand.hbm [shape: f32[2,4], index: 3, kind: output, shape index: {}]
  %s4 = sld [smem:[#allocation0]]
  $region34: #{tpu_custom_call.1} parent=0
    _
  %s6 = ssub.s32 1, %s4
  %s7 = scalar_select 0, %s6, %s4
  $region1: #{tpu_custom_call.1} parent=0
    #allocation2 [shape = 'u8[8192]{0}', space=vmem, size = 0x2000, scoped, tag = 'input window, operand 0, single buffered']
    #allocation3 [shape = 's32[1]{0}', space=sflag, size = 0x4, scoped, tag = 'scoped memory for tpu_custom_call.1']
    #allocation4 [shape = 's32[1]{0}', space=sflag, size = 0x4, scoped, tag = 'scoped memory for tpu_custom_call.1']
    #allocation5 [shape = 'u8[8192]{0}', space=vmem, size = 0x2000, scoped, tag = 'input window, operand 1, single buffered']
    #allocation6 [shape = 's32[1]{0}', space=sflag, size = 0x4, scoped, tag = 'scoped memory for tpu_custom_call.1']
    #allocation7 [shape = 'u8[147456]{0}', space=vmem, size = 0x24000, scoped, tag = 'input window, operand 2, single buffered']
    #allocation8 [shape = 'u8[1024]{0}', space=vmem, size = 0x400, scoped, tag = 'output window, operand 0, single buffered']
    %8 = vsyncpa [#allocation3], 0
    %9 = vsyncpa [#allocation6], 0
    %10 = vsyncpa [#allocation4], 0
    // Predicated region
    $region2: #{tpu_custom_call.1} parent=1 // pred_check
      _
    $region3: #{tpu_custom_call.1} parent=1 // pred_check_branch
      %12 = sbr.rel (0) target = $region5
    $region4: #{tpu_custom_call.1} parent=1 // pred_region
      %s14 = ssub.s32 256, 256
      %15 = vsyncadd [#allocation3], %s14
      %s16 = sshll.u32 [#allocation2], 4
      %s17 = int_to_ptr.vmem [resolvable:$true] %s16
      %22 = dma.hbm_to_vmem [thread:$0]  %s0, 256, %s17, [#allocation3], 128, 128, 8
    $region5: #{tpu_custom_call.1} parent=1 // pred_fallthru
      _
    // Predicated region
    $region6: #{tpu_custom_call.1} parent=1 // pred_check
      _
    $region7: #{tpu_custom_call.1} parent=1 // pred_check_branch
      %24 = sbr.rel (0) target = $region9
    $region8: #{tpu_custom_call.1} parent=1 // pred_region
      %s26 = ssub.s32 256, 256
      %27 = vsyncadd [#allocation6], %s26
      %s28 = sshll.u32 [#allocation5], 4
      %s29 = int_to_ptr.vmem [resolvable:$true] %s28
      %34 = dma.hbm_to_vmem [thread:$0]  %s1, 256, %s29, [#allocation6], 128, 128, 8
    $region9: #{tpu_custom_call.1} parent=1 // pred_fallthru
      _
    // Predicated region
    $region10: #{tpu_custom_call.1} parent=1 // pred_check
      _
    $region11: #{tpu_custom_call.1} parent=1 // pred_check_branch
      %36 = sbr.rel (0) target = $region13
    $region12: #{tpu_custom_call.1} parent=1 // pred_region
      %s38 = ssub.s32 4608, 4608
      %39 = vsyncadd [#allocation6], %s38
      %s40 = sshll.u32 [#allocation7], 4
      %s41 = int_to_ptr.vmem [resolvable:$true] %s40
      %46 = dma.hbm_to_vmem [thread:$0]  %s2, 4608, %s41, [#allocation6], 128, 128, 8
    $region13: #{tpu_custom_call.1} parent=1 // pred_fallthru
      _
    // Predicated region
    $region14: #{tpu_custom_call.1} parent=1 // pred_check
      _
    $region15: #{tpu_custom_call.1} parent=1 // pred_check_branch
      %48 = sbr.rel (0) target = $region17
    $region16: #{tpu_custom_call.1} parent=1 // pred_region
      %49 = dma.done [#allocation3], 256
    $region17: #{tpu_custom_call.1} parent=1 // pred_fallthru
      _
    // Predicated region
    $region18: #{tpu_custom_call.1} parent=1 // pred_check
      _
    $region19: #{tpu_custom_call.1} parent=1 // pred_check_branch
      %51 = sbr.rel (0) target = $region21
    $region20: #{tpu_custom_call.1} parent=1 // pred_region
      %52 = dma.done [#allocation6], 256
    $region21: #{tpu_custom_call.1} parent=1 // pred_fallthru
      _
    // Predicated region
    $region22: #{tpu_custom_call.1} parent=1 // pred_check
      _
    $region23: #{tpu_custom_call.1} parent=1 // pred_check_branch
      %54 = sbr.rel (0) target = $region25
    $region24: #{tpu_custom_call.1} parent=1 // pred_region
      %55 = dma.done [#allocation6], 4608
    $region25: #{tpu_custom_call.1} parent=1 // pred_fallthru
      _
    %v56 = vld [vmem:[#allocation5] sm:$0xff]
    %v57 = vld [vmem:[#allocation5 + $0x8] sm:$0xff]
    %v58 = vld [vmem:[#allocation2] sm:$0xff]
    %v59 = vld [vmem:[#allocation2 + $0x8] sm:$0xff]
    %v60 = vld [vmem:[#allocation7] sm:$0xff]
    %v61 = vld [vmem:[#allocation7 + $0x8] sm:$0xff]
    %v62 = vld [vmem:[#allocation7 + $0x10] sm:$0x1]
    %vm63 = vcmask 130048
    %v65 = vsel %vm63, %v58, 0
    %v68 = vsel %vm63, %v59, 0
    %70 = vmatprep.subr.mxu0 0.0
    %71 = vmatpush1.msra.mxu0 0.0
    %72 = vmatprep.subr.mxu0 0.0
    %73 = vmatpush1.msra.mxu0 0.0
    %74 = vmatprep.subr.mxu0 0.0
    %75 = vmatpush1.msra.mxu0 0.0
    %76 = vmatprep.subr.mxu0 0.0
    %77 = vmatpush1.msra.mxu0 0.0
    %78 = vmatprep.subr.mxu0 0.0
    %79 = vmatpush1.msra.mxu0 0.0
    %80 = vmatprep.subr.mxu0 0.0
    %81 = vmatpush1.msra.mxu0 0.0
    %82 = vmatprep.subr.mxu0 0.0
    %83 = vmatpush1.msra.mxu0 0.0
    %84 = vmatprep.subr.mxu0 0.0
    %85 = vmatpush1.msra.mxu0 0.0
    %86 = vmatprep.subr.mxu0 0.0
    %87 = vmatpush1.msra.mxu0 0.0
    %88 = vmatprep.subr.mxu0 0.0
    %89 = vmatpush1.msra.mxu0 0.0
    %90 = vmatprep.subr.mxu0 0.0
    %91 = vmatpush1.msra.mxu0 0.0
    %92 = vmatprep.subr.mxu0 0.0
    %93 = vmatpush1.msra.mxu0 0.0
    %94 = vmatprep.subr.mxu0 0.0
    %95 = vmatpush1.msra.mxu0 0.0
    %96 = vmatprep.subr.mxu0 0.0
    %97 = vmatpush1.msra.mxu0 0.0
    %98 = vmatprep.subr.mxu0 0.0
    %99 = vmatpush1.msra.mxu0 %v61
    %100 = vmatprep.subr.mxu0 0.0
    %101 = vmatpush1.msra.mxu0 %v60
    %102 = vmatprep.subr.mxu0 0.0
    %103 = vmatpush2.msra.mxu0 0.0
    %104 = vmatprep.subr.mxu0 0.0
    %105 = vmatpush2.msra.mxu0 0.0
    %106 = vmatprep.subr.mxu0 0.0
    %107 = vmatpush2.msra.mxu0 0.0
    %108 = vmatprep.subr.mxu0 0.0
    %109 = vmatpush2.msra.mxu0 0.0
    %110 = vmatprep.subr.mxu0 0.0
    %111 = vmatpush2.msra.mxu0 0.0
    %112 = vmatprep.subr.mxu0 0.0
    %113 = vmatpush2.msra.mxu0 0.0
    %114 = vmatprep.subr.mxu0 0.0
    %115 = vmatpush2.msra.mxu0 0.0
    %116 = vmatprep.subr.mxu0 0.0
    %117 = vmatpush2.msra.mxu0 0.0
    %118 = vmatprep.subr.mxu0 0.0
    %119 = vmatpush2.msra.mxu0 0.0
    %120 = vmatprep.subr.mxu0 0.0
    %121 = vmatpush2.msra.mxu0 0.0
    %122 = vmatprep.subr.mxu0 0.0
    %123 = vmatpush2.msra.mxu0 0.0
    %124 = vmatprep.subr.mxu0 0.0
    %125 = vmatpush2.msra.mxu0 0.0
    %126 = vmatprep.subr.mxu0 0.0
    %127 = vmatpush2.msra.mxu0 0.0
    %128 = vmatprep.subr.mxu0 0.0
    %129 = vmatpush2.msra.mxu0 0.0
    %130 = vmatprep.subr.mxu0 0.0
    %131 = vmatpush2.msra.mxu0 0.0
    %132 = vmatprep.subr.mxu0 0.0
    %133 = vmatpush2.msra.mxu0 0.0
    %134 = vmatprep.mubr.f32.mxu0 0.0
    %135 = vmatmul.mubr.f32.gmra.mxu0 %v65
    %v136 = vpop.f32.mrf.mxu0
    %v137 = vadd.f32 0.0, %v136
    %v138 = vpop.f32.mrf.mxu0
    %139 = vmatprep.mubr.f32.mxu0 0.0
    %140 = vmatmul.mubr.f32.gmra.mxu0 %v68
    %v141 = vpop.f32.mrf.mxu0
    %v142 = vadd.f32 0.0, %v141
    %v143 = vpop.f32.mrf.mxu0
    %144 = vdwg.mxu0
    %v145 = vlaneseq
    %v146 = vshrl.u32 %v145, 7
    %v147 = vsub.s32 0, %v146
    %v148 = vrot.slane %v62, %v147
    %v150 = vsel %vm63, %v56, 0
    %v153 = vsel %vm63, %v57, 0
    %155 = vmatprep.subr.mxu0 0.0
    %156 = vmatpush1.msra.mxu0 0.0
    %157 = vmatprep.subr.mxu0 0.0
    %158 = vmatpush1.msra.mxu0 0.0
    %159 = vmatprep.subr.mxu0 0.0
    %160 = vmatpush1.msra.mxu0 0.0
    %161 = vmatprep.subr.mxu0 0.0
    %162 = vmatpush1.msra.mxu0 0.0
    %163 = vmatprep.subr.mxu0 0.0
    %164 = vmatpush1.msra.mxu0 0.0
    %165 = vmatprep.subr.mxu0 0.0
    %166 = vmatpush1.msra.mxu0 0.0
    %167 = vmatprep.subr.mxu0 0.0
    %168 = vmatpush1.msra.mxu0 0.0
    %169 = vmatprep.subr.mxu0 0.0
    %170 = vmatpush1.msra.mxu0 0.0
    %171 = vmatprep.subr.mxu0 0.0
    %172 = vmatpush1.msra.mxu0 0.0
    %173 = vmatprep.subr.mxu0 0.0
    %174 = vmatpush1.msra.mxu0 0.0
    %175 = vmatprep.subr.mxu0 0.0
    %176 = vmatpush1.msra.mxu0 0.0
    %177 = vmatprep.subr.mxu0 0.0
    %178 = vmatpush1.msra.mxu0 0.0
    %179 = vmatprep.subr.mxu0 0.0
    %180 = vmatpush1.msra.mxu0 0.0
    %181 = vmatprep.subr.mxu0 0.0
    %182 = vmatpush1.msra.mxu0 0.0
    %183 = vmatprep.subr.mxu0 0.0
    %184 = vmatpush1.msra.mxu0 %v142
    %185 = vmatprep.subr.mxu0 0.0
    %186 = vmatpush1.msra.mxu0 %v137
    %187 = vmatprep.subr.mxu0 0.0
    %188 = vmatpush2.msra.mxu0 0.0
    %189 = vmatprep.subr.mxu0 0.0
    %190 = vmatpush2.msra.mxu0 0.0
    %191 = vmatprep.subr.mxu0 0.0
    %192 = vmatpush2.msra.mxu0 0.0
    %193 = vmatprep.subr.mxu0 0.0
    %194 = vmatpush2.msra.mxu0 0.0
    %195 = vmatprep.subr.mxu0 0.0
    %196 = vmatpush2.msra.mxu0 0.0
    %197 = vmatprep.subr.mxu0 0.0
    %198 = vmatpush2.msra.mxu0 0.0
    %199 = vmatprep.subr.mxu0 0.0
    %200 = vmatpush2.msra.mxu0 0.0
    %201 = vmatprep.subr.mxu0 0.0
    %202 = vmatpush2.msra.mxu0 0.0
    %203 = vmatprep.subr.mxu0 0.0
    %204 = vmatpush2.msra.mxu0 0.0
    %205 = vmatprep.subr.mxu0 0.0
    %206 = vmatpush2.msra.mxu0 0.0
    %207 = vmatprep.subr.mxu0 0.0
    %208 = vmatpush2.msra.mxu0 0.0
    %209 = vmatprep.subr.mxu0 0.0
    %210 = vmatpush2.msra.mxu0 0.0
    %211 = vmatprep.subr.mxu0 0.0
    %212 = vmatpush2.msra.mxu0 0.0
    %213 = vmatprep.subr.mxu0 0.0
    %214 = vmatpush2.msra.mxu0 0.0
    %215 = vmatprep.subr.mxu0 0.0
    %216 = vmatpush2.msra.mxu0 0.0
    %217 = vmatprep.subr.mxu0 0.0
    %218 = vmatpush2.msra.mxu0 0.0
    %219 = vmatprep.mubr.f32.mxu0 0.0
    %220 = vmatmul.mubr.f32.gmra.mxu0 %v150
    %v221 = vpop.f32.mrf.mxu0
    %v222 = vadd.f32 %v148, %v221
    %v223 = vpop.f32.mrf.mxu0
    %224 = vmatprep.mubr.f32.mxu0 0.0
    %225 = vmatmul.mubr.f32.gmra.mxu0 %v153
    %v226 = vpop.f32.mrf.mxu0
    %v227 = vadd.f32 %v148, %v226
    %v228 = vpop.f32.mrf.mxu0
    %229 = vdwg.mxu0
    %v230 = vmax.f32 %v222, 0.0
    %v231 = vmax.f32 %v227, 0.0
    %v232 = vld [vmem:[#allocation7 + $0x18] sm:$0xff]
    %v233 = vld [vmem:[#allocation7 + $0x20] sm:$0xff]
    %v234 = vld [vmem:[#allocation7 + $0x28] sm:$0xff]
    %v235 = vld [vmem:[#allocation7 + $0x30] sm:$0xff]
    %v236 = vld [vmem:[#allocation7 + $0x38] sm:$0x1]
    %vm237 = vcmask 261120
    %v239 = vsel %vm237, %v230, 0
    %v242 = vsel %vm237, %v231, 0
    %244 = vmatprep.subr.mxu0 0.0
    %245 = vmatpush1.msra.mxu0 0.0
    %246 = vmatprep.subr.mxu0 0.0
    %247 = vmatpush1.msra.mxu0 0.0
    %248 = vmatprep.subr.mxu0 0.0
    %249 = vmatpush1.msra.mxu0 0.0
    %250 = vmatprep.subr.mxu0 0.0
    %251 = vmatpush1.msra.mxu0 0.0
    %252 = vmatprep.subr.mxu0 0.0
    %253 = vmatpush1.msra.mxu0 0.0
    %254 = vmatprep.subr.mxu0 0.0
    %255 = vmatpush1.msra.mxu0 0.0
    %256 = vmatprep.subr.mxu0 0.0
    %257 = vmatpush1.msra.mxu0 0.0
    %258 = vmatprep.subr.mxu0 0.0
    %259 = vmatpush1.msra.mxu0 0.0
    %260 = vmatprep.subr.mxu0 0.0
    %261 = vmatpush1.msra.mxu0 0.0
    %262 = vmatprep.subr.mxu0 0.0
    %263 = vmatpush1.msra.mxu0 0.0
    %264 = vmatprep.subr.mxu0 0.0
    %265 = vmatpush1.msra.mxu0 0.0
    %266 = vmatprep.subr.mxu0 0.0
    %267 = vmatpush1.msra.mxu0 0.0
    %268 = vmatprep.subr.mxu0 0.0
    %269 = vmatpush1.msra.mxu0 %v235
    %270 = vmatprep.subr.mxu0 0.0
    %271 = vmatpush1.msra.mxu0 %v234
    %272 = vmatprep.subr.mxu0 0.0
    %273 = vmatpush1.msra.mxu0 %v233
    %274 = vmatprep.subr.mxu0 0.0
    %275 = vmatpush1.msra.mxu0 %v232
    %276 = vmatprep.subr.mxu0 0.0
    %277 = vmatpush2.msra.mxu0 0.0
    %278 = vmatprep.subr.mxu0 0.0
    %279 = vmatpush2.msra.mxu0 0.0
    %280 = vmatprep.subr.mxu0 0.0
    %281 = vmatpush2.msra.mxu0 0.0
    %282 = vmatprep.subr.mxu0 0.0
    %283 = vmatpush2.msra.mxu0 0.0
    %284 = vmatprep.subr.mxu0 0.0
    %285 = vmatpush2.msra.mxu0 0.0
    %286 = vmatprep.subr.mxu0 0.0
    %287 = vmatpush2.msra.mxu0 0.0
    %288 = vmatprep.subr.mxu0 0.0
    %289 = vmatpush2.msra.mxu0 0.0
    %290 = vmatprep.subr.mxu0 0.0
    %291 = vmatpush2.msra.mxu0 0.0
    %292 = vmatprep.subr.mxu0 0.0
    %293 = vmatpush2.msra.mxu0 0.0
    %294 = vmatprep.subr.mxu0 0.0
    %295 = vmatpush2.msra.mxu0 0.0
    %296 = vmatprep.subr.mxu0 0.0
    %297 = vmatpush2.msra.mxu0 0.0
    %298 = vmatprep.subr.mxu0 0.0
    %299 = vmatpush2.msra.mxu0 0.0
    %300 = vmatprep.subr.mxu0 0.0
    %301 = vmatpush2.msra.mxu0 0.0
    %302 = vmatprep.subr.mxu0 0.0
    %303 = vmatpush2.msra.mxu0 0.0
    %304 = vmatprep.subr.mxu0 0.0
    %305 = vmatpush2.msra.mxu0 0.0
    %306 = vmatprep.subr.mxu0 0.0
    %307 = vmatpush2.msra.mxu0 0.0
    %308 = vmatprep.mubr.f32.mxu0 0.0
    %309 = vmatmul.mubr.f32.gmra.mxu0 %v239
    %v310 = vpop.f32.mrf.mxu0
    %v311 = vadd.f32 0.0, %v310
    %v312 = vpop.f32.mrf.mxu0
    %313 = vmatprep.mubr.f32.mxu0 0.0
    %314 = vmatmul.mubr.f32.gmra.mxu0 %v242
    %v315 = vpop.f32.mrf.mxu0
    %v316 = vadd.f32 0.0, %v315
    %v317 = vpop.f32.mrf.mxu0
    %318 = vdwg.mxu0
    %v319 = vlaneseq
    %v320 = vshrl.u32 %v319, 7
    %v321 = vsub.s32 0, %v320
    %v322 = vrot.slane %v236, %v321
    %323 = vmatprep.subr.mxu0 0.0
    %324 = vmatpush1.msra.mxu0 0.0
    %325 = vmatprep.subr.mxu0 0.0
    %326 = vmatpush1.msra.mxu0 0.0
    %327 = vmatprep.subr.mxu0 0.0
    %328 = vmatpush1.msra.mxu0 0.0
    %329 = vmatprep.subr.mxu0 0.0
    %330 = vmatpush1.msra.mxu0 0.0
    %331 = vmatprep.subr.mxu0 0.0
    %332 = vmatpush1.msra.mxu0 0.0
    %333 = vmatprep.subr.mxu0 0.0
    %334 = vmatpush1.msra.mxu0 0.0
    %335 = vmatprep.subr.mxu0 0.0
    %336 = vmatpush1.msra.mxu0 0.0
    %337 = vmatprep.subr.mxu0 0.0
    %338 = vmatpush1.msra.mxu0 0.0
    %339 = vmatprep.subr.mxu0 0.0
    %340 = vmatpush1.msra.mxu0 0.0
    %341 = vmatprep.subr.mxu0 0.0
    %342 = vmatpush1.msra.mxu0 0.0
    %343 = vmatprep.subr.mxu0 0.0
    %344 = vmatpush1.msra.mxu0 0.0
    %345 = vmatprep.subr.mxu0 0.0
    %346 = vmatpush1.msra.mxu0 0.0
    %347 = vmatprep.subr.mxu0 0.0
    %348 = vmatpush1.msra.mxu0 0.0
    %349 = vmatprep.subr.mxu0 0.0
    %350 = vmatpush1.msra.mxu0 0.0
    %351 = vmatprep.subr.mxu0 0.0
    %352 = vmatpush1.msra.mxu0 %v316
    %353 = vmatprep.subr.mxu0 0.0
    %354 = vmatpush1.msra.mxu0 %v311
    %355 = vmatprep.subr.mxu0 0.0
    %356 = vmatpush2.msra.mxu0 0.0
    %357 = vmatprep.subr.mxu0 0.0
    %358 = vmatpush2.msra.mxu0 0.0
    %359 = vmatprep.subr.mxu0 0.0
    %360 = vmatpush2.msra.mxu0 0.0
    %361 = vmatprep.subr.mxu0 0.0
    %362 = vmatpush2.msra.mxu0 0.0
    %363 = vmatprep.subr.mxu0 0.0
    %364 = vmatpush2.msra.mxu0 0.0
    %365 = vmatprep.subr.mxu0 0.0
    %366 = vmatpush2.msra.mxu0 0.0
    %367 = vmatprep.subr.mxu0 0.0
    %368 = vmatpush2.msra.mxu0 0.0
    %369 = vmatprep.subr.mxu0 0.0
    %370 = vmatpush2.msra.mxu0 0.0
    %371 = vmatprep.subr.mxu0 0.0
    %372 = vmatpush2.msra.mxu0 0.0
    %373 = vmatprep.subr.mxu0 0.0
    %374 = vmatpush2.msra.mxu0 0.0
    %375 = vmatprep.subr.mxu0 0.0
    %376 = vmatpush2.msra.mxu0 0.0
    %377 = vmatprep.subr.mxu0 0.0
    %378 = vmatpush2.msra.mxu0 0.0
    %379 = vmatprep.subr.mxu0 0.0
    %380 = vmatpush2.msra.mxu0 0.0
    %381 = vmatprep.subr.mxu0 0.0
    %382 = vmatpush2.msra.mxu0 0.0
    %383 = vmatprep.subr.mxu0 0.0
    %384 = vmatpush2.msra.mxu0 0.0
    %385 = vmatprep.subr.mxu0 0.0
    %386 = vmatpush2.msra.mxu0 0.0
    %387 = vmatprep.mubr.f32.mxu0 0.0
    %388 = vmatmul.mubr.f32.gmra.mxu0 %v150
    %v389 = vpop.f32.mrf.mxu0
    %v390 = vadd.f32 %v322, %v389
    %v391 = vpop.f32.mrf.mxu0
    %392 = vmatprep.mubr.f32.mxu0 0.0
    %393 = vmatmul.mubr.f32.gmra.mxu0 %v153
    %v394 = vpop.f32.mrf.mxu0
    %v395 = vadd.f32 %v322, %v394
    %v396 = vpop.f32.mrf.mxu0
    %397 = vdwg.mxu0
    %v398 = vmax.f32 %v390, 0.0
    %v399 = vmax.f32 %v395, 0.0
    %v400 = vld [vmem:[#allocation7 + $0x40] sm:$0xff]
    %v401 = vld [vmem:[#allocation7 + $0x48] sm:$0xff]
    %v402 = vld [vmem:[#allocation7 + $0x50] sm:$0xff]
    %v403 = vld [vmem:[#allocation7 + $0x58] sm:$0xff]
    %v404 = vld [vmem:[#allocation7 + $0x60] sm:$0xff]
    %v405 = vld [vmem:[#allocation7 + $0x68] sm:$0xff]
    %v406 = vld [vmem:[#allocation7 + $0x70] sm:$0xff]
    %v407 = vld [vmem:[#allocation7 + $0x78] sm:$0xff]
    %v408 = vld [vmem:[#allocation7 + $0x80] sm:$0x1]
    %vm409 = vcmask 523264
    %v411 = vsel %vm409, %v398, 0
    %v414 = vsel %vm409, %v399, 0
    %416 = vmatprep.subr.mxu0 0.0
    %417 = vmatpush1.msra.mxu0 0.0
    %418 = vmatprep.subr.mxu0 0.0
    %419 = vmatpush1.msra.mxu0 0.0
    %420 = vmatprep.subr.mxu0 0.0
    %421 = vmatpush1.msra.mxu0 0.0
    %422 = vmatprep.subr.mxu0 0.0
    %423 = vmatpush1.msra.mxu0 0.0
    %424 = vmatprep.subr.mxu0 0.0
    %425 = vmatpush1.msra.mxu0 0.0
    %426 = vmatprep.subr.mxu0 0.0
    %427 = vmatpush1.msra.mxu0 0.0
    %428 = vmatprep.subr.mxu0 0.0
    %429 = vmatpush1.msra.mxu0 0.0
    %430 = vmatprep.subr.mxu0 0.0
    %431 = vmatpush1.msra.mxu0 0.0
    %432 = vmatprep.subr.mxu0 0.0
    %433 = vmatpush1.msra.mxu0 %v407
    %434 = vmatprep.subr.mxu0 0.0
    %435 = vmatpush1.msra.mxu0 %v406
    %436 = vmatprep.subr.mxu0 0.0
    %437 = vmatpush1.msra.mxu0 %v405
    %438 = vmatprep.subr.mxu0 0.0
    %439 = vmatpush1.msra.mxu0 %v404
    %440 = vmatprep.subr.mxu0 0.0
    %441 = vmatpush1.msra.mxu0 %v403
    %442 = vmatprep.subr.mxu0 0.0
    %443 = vmatpush1.msra.mxu0 %v402
    %444 = vmatprep.subr.mxu0 0.0
    %445 = vmatpush1.msra.mxu0 %v401
    %446 = vmatprep.subr.mxu0 0.0
    %447 = vmatpush1.msra.mxu0 %v400
    %448 = vmatprep.subr.mxu0 0.0
    %449 = vmatpush2.msra.mxu0 0.0
    %450 = vmatprep.subr.mxu0 0.0
    %451 = vmatpush2.msra.mxu0 0.0
    %452 = vmatprep.subr.mxu0 0.0
    %453 = vmatpush2.msra.mxu0 0.0
    %454 = vmatprep.subr.mxu0 0.0
    %455 = vmatpush2.msra.mxu0 0.0
    %456 = vmatprep.subr.mxu0 0.0
    %457 = vmatpush2.msra.mxu0 0.0
    %458 = vmatprep.subr.mxu0 0.0
    %459 = vmatpush2.msra.mxu0 0.0
    %460 = vmatprep.subr.mxu0 0.0
    %461 = vmatpush2.msra.mxu0 0.0
    %462 = vmatprep.subr.mxu0 0.0
    %463 = vmatpush2.msra.mxu0 0.0
    %464 = vmatprep.subr.mxu0 0.0
    %465 = vmatpush2.msra.mxu0 0.0
    %466 = vmatprep.subr.mxu0 0.0
    %467 = vmatpush2.msra.mxu0 0.0
    %468 = vmatprep.subr.mxu0 0.0
    %469 = vmatpush2.msra.mxu0 0.0
    %470 = vmatprep.subr.mxu0 0.0
    %471 = vmatpush2.msra.mxu0 0.0
    %472 = vmatprep.subr.mxu0 0.0
    %473 = vmatpush2.msra.mxu0 0.0
    %474 = vmatprep.subr.mxu0 0.0
    %475 = vmatpush2.msra.mxu0 0.0
    %476 = vmatprep.subr.mxu0 0.0
    %477 = vmatpush2.msra.mxu0 0.0
    %478 = vmatprep.subr.mxu0 0.0
    %479 = vmatpush2.msra.mxu0 0.0
    %480 = vmatprep.mubr.f32.mxu0 0.0
    %481 = vmatmul.mubr.f32.gmra.mxu0 %v411
    %v482 = vpop.f32.mrf.mxu0
    %v483 = vadd.f32 0.0, %v482
    %v484 = vpop.f32.mrf.mxu0
    %485 = vmatprep.mubr.f32.mxu0 0.0
    %486 = vmatmul.mubr.f32.gmra.mxu0 %v414
    %v487 = vpop.f32.mrf.mxu0
    %v488 = vadd.f32 0.0, %v487
    %v489 = vpop.f32.mrf.mxu0
    %490 = vdwg.mxu0
    %v491 = vlaneseq
    %v492 = vshrl.u32 %v491, 7
    %v493 = vsub.s32 0, %v492
    %v494 = vrot.slane %v408, %v493
    %495 = vmatprep.subr.mxu0 0.0
    %496 = vmatpush1.msra.mxu0 0.0
    %497 = vmatprep.subr.mxu0 0.0
    %498 = vmatpush1.msra.mxu0 0.0
    %499 = vmatprep.subr.mxu0 0.0
    %500 = vmatpush1.msra.mxu0 0.0
    %501 = vmatprep.subr.mxu0 0.0
    %502 = vmatpush1.msra.mxu0 0.0
    %503 = vmatprep.subr.mxu0 0.0
    %504 = vmatpush1.msra.mxu0 0.0
    %505 = vmatprep.subr.mxu0 0.0
    %506 = vmatpush1.msra.mxu0 0.0
    %507 = vmatprep.subr.mxu0 0.0
    %508 = vmatpush1.msra.mxu0 0.0
    %509 = vmatprep.subr.mxu0 0.0
    %510 = vmatpush1.msra.mxu0 0.0
    %511 = vmatprep.subr.mxu0 0.0
    %512 = vmatpush1.msra.mxu0 0.0
    %513 = vmatprep.subr.mxu0 0.0
    %514 = vmatpush1.msra.mxu0 0.0
    %515 = vmatprep.subr.mxu0 0.0
    %516 = vmatpush1.msra.mxu0 0.0
    %517 = vmatprep.subr.mxu0 0.0
    %518 = vmatpush1.msra.mxu0 0.0
    %519 = vmatprep.subr.mxu0 0.0
    %520 = vmatpush1.msra.mxu0 0.0
    %521 = vmatprep.subr.mxu0 0.0
    %522 = vmatpush1.msra.mxu0 0.0
    %523 = vmatprep.subr.mxu0 0.0
    %524 = vmatpush1.msra.mxu0 %v488
    %525 = vmatprep.subr.mxu0 0.0
    %526 = vmatpush1.msra.mxu0 %v483
    %527 = vmatprep.subr.mxu0 0.0
    %528 = vmatpush2.msra.mxu0 0.0
    %529 = vmatprep.subr.mxu0 0.0
    %530 = vmatpush2.msra.mxu0 0.0
    %531 = vmatprep.subr.mxu0 0.0
    %532 = vmatpush2.msra.mxu0 0.0
    %533 = vmatprep.subr.mxu0 0.0
    %534 = vmatpush2.msra.mxu0 0.0
    %535 = vmatprep.subr.mxu0 0.0
    %536 = vmatpush2.msra.mxu0 0.0
    %537 = vmatprep.subr.mxu0 0.0
    %538 = vmatpush2.msra.mxu0 0.0
    %539 = vmatprep.subr.mxu0 0.0
    %540 = vmatpush2.msra.mxu0 0.0
    %541 = vmatprep.subr.mxu0 0.0
    %542 = vmatpush2.msra.mxu0 0.0
    %543 = vmatprep.subr.mxu0 0.0
    %544 = vmatpush2.msra.mxu0 0.0
    %545 = vmatprep.subr.mxu0 0.0
    %546 = vmatpush2.msra.mxu0 0.0
    %547 = vmatprep.subr.mxu0 0.0
    %548 = vmatpush2.msra.mxu0 0.0
    %549 = vmatprep.subr.mxu0 0.0
    %550 = vmatpush2.msra.mxu0 0.0
    %551 = vmatprep.subr.mxu0 0.0
    %552 = vmatpush2.msra.mxu0 0.0
    %553 = vmatprep.subr.mxu0 0.0
    %554 = vmatpush2.msra.mxu0 0.0
    %555 = vmatprep.subr.mxu0 0.0
    %556 = vmatpush2.msra.mxu0 0.0
    %557 = vmatprep.subr.mxu0 0.0
    %558 = vmatpush2.msra.mxu0 0.0
    %559 = vmatprep.mubr.f32.mxu0 0.0
    %560 = vmatmul.mubr.f32.gmra.mxu0 %v150
    %v561 = vpop.f32.mrf.mxu0
    %v562 = vadd.f32 %v494, %v561
    %v563 = vpop.f32.mrf.mxu0
    %564 = vmatprep.mubr.f32.mxu0 0.0
    %565 = vmatmul.mubr.f32.gmra.mxu0 %v153
    %v566 = vpop.f32.mrf.mxu0
    %v567 = vadd.f32 %v494, %v566
    %v568 = vpop.f32.mrf.mxu0
    %569 = vdwg.mxu0
    %v570 = vmax.f32 %v562, 0.0
    %v571 = vmax.f32 %v567, 0.0
    %v572 = vld [vmem:[#allocation7 + $0x88] sm:$0xff]
    %v573 = vld [vmem:[#allocation7 + $0x90] sm:$0xff]
    %v574 = vld [vmem:[#allocation7 + $0x98] sm:$0xff]
    %v575 = vld [vmem:[#allocation7 + $0xa0] sm:$0xff]
    %v578 = vrot.slane %v570, 1
    %vm579 = vcmask 1041409
    %v580 = vsel %vm579, %v571, %v578
    %v581 = vsel %vm63, %v580, 0
    %583 = vmatprep.subr.mxu0 0.0
    %584 = vmatpush1.msra.mxu0 0.0
    %585 = vmatprep.subr.mxu0 0.0
    %586 = vmatpush1.msra.mxu0 0.0
    %587 = vmatprep.subr.mxu0 0.0
    %588 = vmatpush1.msra.mxu0 0.0
    %589 = vmatprep.subr.mxu0 0.0
    %590 = vmatpush1.msra.mxu0 0.0
    %591 = vmatprep.subr.mxu0 0.0
    %592 = vmatpush1.msra.mxu0 0.0
    %593 = vmatprep.subr.mxu0 0.0
    %594 = vmatpush1.msra.mxu0 0.0
    %595 = vmatprep.subr.mxu0 0.0
    %596 = vmatpush1.msra.mxu0 0.0
    %597 = vmatprep.subr.mxu0 0.0
    %598 = vmatpush1.msra.mxu0 0.0
    %599 = vmatprep.subr.mxu0 0.0
    %600 = vmatpush1.msra.mxu0 0.0
    %601 = vmatprep.subr.mxu0 0.0
    %602 = vmatpush1.msra.mxu0 0.0
    %603 = vmatprep.subr.mxu0 0.0
    %604 = vmatpush1.msra.mxu0 0.0
    %605 = vmatprep.subr.mxu0 0.0
    %606 = vmatpush1.msra.mxu0 0.0
    %607 = vmatprep.subr.mxu0 0.0
    %608 = vmatpush1.msra.mxu0 0.0
    %609 = vmatprep.subr.mxu0 0.0
    %610 = vmatpush1.msra.mxu0 0.0
    %611 = vmatprep.subr.mxu0 0.0
    %612 = vmatpush1.msra.mxu0 %v575
    %613 = vmatprep.subr.mxu0 0.0
    %614 = vmatpush1.msra.mxu0 %v574
    %615 = vmatprep.subr.mxu0 0.0
    %616 = vmatpush2.msra.mxu0 0.0
    %617 = vmatprep.subr.mxu0 0.0
    %618 = vmatpush2.msra.mxu0 0.0
    %619 = vmatprep.subr.mxu0 0.0
    %620 = vmatpush2.msra.mxu0 0.0
    %621 = vmatprep.subr.mxu0 0.0
    %622 = vmatpush2.msra.mxu0 0.0
    %623 = vmatprep.subr.mxu0 0.0
    %624 = vmatpush2.msra.mxu0 0.0
    %625 = vmatprep.subr.mxu0 0.0
    %626 = vmatpush2.msra.mxu0 0.0
    %627 = vmatprep.subr.mxu0 0.0
    %628 = vmatpush2.msra.mxu0 0.0
    %629 = vmatprep.subr.mxu0 0.0
    %630 = vmatpush2.msra.mxu0 0.0
    %631 = vmatprep.subr.mxu0 0.0
    %632 = vmatpush2.msra.mxu0 0.0
    %633 = vmatprep.subr.mxu0 0.0
    %634 = vmatpush2.msra.mxu0 0.0
    %635 = vmatprep.subr.mxu0 0.0
    %636 = vmatpush2.msra.mxu0 0.0
    %637 = vmatprep.subr.mxu0 0.0
    %638 = vmatpush2.msra.mxu0 0.0
    %639 = vmatprep.subr.mxu0 0.0
    %640 = vmatpush2.msra.mxu0 0.0
    %641 = vmatprep.subr.mxu0 0.0
    %642 = vmatpush2.msra.mxu0 0.0
    %643 = vmatprep.subr.mxu0 0.0
    %644 = vmatpush2.msra.mxu0 0.0
    %645 = vmatprep.subr.mxu0 0.0
    %646 = vmatpush2.msra.mxu0 0.0
    %647 = vmatprep.mubr.f32.mxu0 0.0
    %648 = vmatmul.mubr.f32.gmra.mxu0 %v581
    %v649 = vpop.f32.mrf.mxu0
    %v650 = vadd.f32 0.0, %v649
    %v651 = vpop.f32.mrf.mxu0
    %652 = vdwg.mxu0
    %v653 = vld [vmem:[#allocation7 + $0xa8] sm:$0xff]
    %v654 = vld [vmem:[#allocation7 + $0xb0] sm:$0xff]
    %v655 = vld [vmem:[#allocation7 + $0xb8] sm:$0xff]
    %v656 = vld [vmem:[#allocation7 + $0xc0] sm:$0xff]
    %v657 = vrot.slane %v570, 3
    %v658 = vrot.slane %v571, 2
    %v659 = vsel %vm579, %v658, %v657
    %v660 = vsel %vm63, %v659, 0
    %662 = vmatprep.subr.mxu0 0.0
    %663 = vmatpush1.msra.mxu0 0.0
    %664 = vmatprep.subr.mxu0 0.0
    %665 = vmatpush1.msra.mxu0 0.0
    %666 = vmatprep.subr.mxu0 0.0
    %667 = vmatpush1.msra.mxu0 0.0
    %668 = vmatprep.subr.mxu0 0.0
    %669 = vmatpush1.msra.mxu0 0.0
    %670 = vmatprep.subr.mxu0 0.0
    %671 = vmatpush1.msra.mxu0 0.0
    %672 = vmatprep.subr.mxu0 0.0
    %673 = vmatpush1.msra.mxu0 0.0
    %674 = vmatprep.subr.mxu0 0.0
    %675 = vmatpush1.msra.mxu0 0.0
    %676 = vmatprep.subr.mxu0 0.0
    %677 = vmatpush1.msra.mxu0 0.0
    %678 = vmatprep.subr.mxu0 0.0
    %679 = vmatpush1.msra.mxu0 0.0
    %680 = vmatprep.subr.mxu0 0.0
    %681 = vmatpush1.msra.mxu0 0.0
    %682 = vmatprep.subr.mxu0 0.0
    %683 = vmatpush1.msra.mxu0 0.0
    %684 = vmatprep.subr.mxu0 0.0
    %685 = vmatpush1.msra.mxu0 0.0
    %686 = vmatprep.subr.mxu0 0.0
    %687 = vmatpush1.msra.mxu0 0.0
    %688 = vmatprep.subr.mxu0 0.0
    %689 = vmatpush1.msra.mxu0 0.0
    %690 = vmatprep.subr.mxu0 0.0
    %691 = vmatpush1.msra.mxu0 %v656
    %692 = vmatprep.subr.mxu0 0.0
    %693 = vmatpush1.msra.mxu0 %v655
    %694 = vmatprep.subr.mxu0 0.0
    %695 = vmatpush2.msra.mxu0 0.0
    %696 = vmatprep.subr.mxu0 0.0
    %697 = vmatpush2.msra.mxu0 0.0
    %698 = vmatprep.subr.mxu0 0.0
    %699 = vmatpush2.msra.mxu0 0.0
    %700 = vmatprep.subr.mxu0 0.0
    %701 = vmatpush2.msra.mxu0 0.0
    %702 = vmatprep.subr.mxu0 0.0
    %703 = vmatpush2.msra.mxu0 0.0
    %704 = vmatprep.subr.mxu0 0.0
    %705 = vmatpush2.msra.mxu0 0.0
    %706 = vmatprep.subr.mxu0 0.0
    %707 = vmatpush2.msra.mxu0 0.0
    %708 = vmatprep.subr.mxu0 0.0
    %709 = vmatpush2.msra.mxu0 0.0
    %710 = vmatprep.subr.mxu0 0.0
    %711 = vmatpush2.msra.mxu0 0.0
    %712 = vmatprep.subr.mxu0 0.0
    %713 = vmatpush2.msra.mxu0 0.0
    %714 = vmatprep.subr.mxu0 0.0
    %715 = vmatpush2.msra.mxu0 0.0
    %716 = vmatprep.subr.mxu0 0.0
    %717 = vmatpush2.msra.mxu0 0.0
    %718 = vmatprep.subr.mxu0 0.0
    %719 = vmatpush2.msra.mxu0 0.0
    %720 = vmatprep.subr.mxu0 0.0
    %721 = vmatpush2.msra.mxu0 0.0
    %722 = vmatprep.subr.mxu0 0.0
    %723 = vmatpush2.msra.mxu0 0.0
    %724 = vmatprep.subr.mxu0 0.0
    %725 = vmatpush2.msra.mxu0 0.0
    %726 = vmatprep.mubr.f32.mxu0 0.0
    %727 = vmatmul.mubr.f32.gmra.mxu0 %v660
    %v728 = vpop.f32.mrf.mxu0
    %v729 = vadd.f32 0.0, %v728
    %v730 = vpop.f32.mrf.mxu0
    %731 = vdwg.mxu0
    %v732 = vld [vmem:[#allocation7 + $0xc8] sm:$0xff]
    %v733 = vld [vmem:[#allocation7 + $0xd0] sm:$0xff]
    %v734 = vld [vmem:[#allocation7 + $0xd8] sm:$0xff]
    %v735 = vld [vmem:[#allocation7 + $0xe0] sm:$0xff]
    %v736 = vrot.slane %v570, 5
    %v737 = vrot.slane %v571, 4
    %v738 = vsel %vm579, %v737, %v736
    %v739 = vsel %vm63, %v738, 0
    %741 = vmatprep.subr.mxu0 0.0
    %742 = vmatpush1.msra.mxu0 0.0
    %743 = vmatprep.subr.mxu0 0.0
    %744 = vmatpush1.msra.mxu0 0.0
    %745 = vmatprep.subr.mxu0 0.0
    %746 = vmatpush1.msra.mxu0 0.0
    %747 = vmatprep.subr.mxu0 0.0
    %748 = vmatpush1.msra.mxu0 0.0
    %749 = vmatprep.subr.mxu0 0.0
    %750 = vmatpush1.msra.mxu0 0.0
    %751 = vmatprep.subr.mxu0 0.0
    %752 = vmatpush1.msra.mxu0 0.0
    %753 = vmatprep.subr.mxu0 0.0
    %754 = vmatpush1.msra.mxu0 0.0
    %755 = vmatprep.subr.mxu0 0.0
    %756 = vmatpush1.msra.mxu0 0.0
    %757 = vmatprep.subr.mxu0 0.0
    %758 = vmatpush1.msra.mxu0 0.0
    %759 = vmatprep.subr.mxu0 0.0
    %760 = vmatpush1.msra.mxu0 0.0
    %761 = vmatprep.subr.mxu0 0.0
    %762 = vmatpush1.msra.mxu0 0.0
    %763 = vmatprep.subr.mxu0 0.0
    %764 = vmatpush1.msra.mxu0 0.0
    %765 = vmatprep.subr.mxu0 0.0
    %766 = vmatpush1.msra.mxu0 0.0
    %767 = vmatprep.subr.mxu0 0.0
    %768 = vmatpush1.msra.mxu0 0.0
    %769 = vmatprep.subr.mxu0 0.0
    %770 = vmatpush1.msra.mxu0 %v735
    %771 = vmatprep.subr.mxu0 0.0
    %772 = vmatpush1.msra.mxu0 %v734
    %773 = vmatprep.subr.mxu0 0.0
    %774 = vmatpush2.msra.mxu0 0.0
    %775 = vmatprep.subr.mxu0 0.0
    %776 = vmatpush2.msra.mxu0 0.0
    %777 = vmatprep.subr.mxu0 0.0
    %778 = vmatpush2.msra.mxu0 0.0
    %779 = vmatprep.subr.mxu0 0.0
    %780 = vmatpush2.msra.mxu0 0.0
    %781 = vmatprep.subr.mxu0 0.0
    %782 = vmatpush2.msra.mxu0 0.0
    %783 = vmatprep.subr.mxu0 0.0
    %784 = vmatpush2.msra.mxu0 0.0
    %785 = vmatprep.subr.mxu0 0.0
    %786 = vmatpush2.msra.mxu0 0.0
    %787 = vmatprep.subr.mxu0 0.0
    %788 = vmatpush2.msra.mxu0 0.0
    %789 = vmatprep.subr.mxu0 0.0
    %790 = vmatpush2.msra.mxu0 0.0
    %791 = vmatprep.subr.mxu0 0.0
    %792 = vmatpush2.msra.mxu0 0.0
    %793 = vmatprep.subr.mxu0 0.0
    %794 = vmatpush2.msra.mxu0 0.0
    %795 = vmatprep.subr.mxu0 0.0
    %796 = vmatpush2.msra.mxu0 0.0
    %797 = vmatprep.subr.mxu0 0.0
    %798 = vmatpush2.msra.mxu0 0.0
    %799 = vmatprep.subr.mxu0 0.0
    %800 = vmatpush2.msra.mxu0 0.0
    %801 = vmatprep.subr.mxu0 0.0
    %802 = vmatpush2.msra.mxu0 0.0
    %803 = vmatprep.subr.mxu0 0.0
    %804 = vmatpush2.msra.mxu0 0.0
    %805 = vmatprep.mubr.f32.mxu0 0.0
    %806 = vmatmul.mubr.f32.gmra.mxu0 %v739
    %v807 = vpop.f32.mrf.mxu0
    %v808 = vadd.f32 0.0, %v807
    %v809 = vpop.f32.mrf.mxu0
    %810 = vdwg.mxu0
    %v811 = vld [vmem:[#allocation7 + $0xe8] sm:$0xff]
    %v812 = vld [vmem:[#allocation7 + $0xf0] sm:$0xff]
    %v813 = vld [vmem:[#allocation7 + $0xf8] sm:$0xff]
    %v814 = vld [vmem:[#allocation7 + $0x100] sm:$0xff]
    %v815 = vrot.slane %v570, 7
    %v816 = vrot.slane %v571, 6
    %v817 = vsel %vm579, %v816, %v815
    %v818 = vsel %vm63, %v817, 0
    %820 = vmatprep.subr.mxu0 0.0
    %821 = vmatpush1.msra.mxu0 0.0
    %822 = vmatprep.subr.mxu0 0.0
    %823 = vmatpush1.msra.mxu0 0.0
    %824 = vmatprep.subr.mxu0 0.0
    %825 = vmatpush1.msra.mxu0 0.0
    %826 = vmatprep.subr.mxu0 0.0
    %827 = vmatpush1.msra.mxu0 0.0
    %828 = vmatprep.subr.mxu0 0.0
    %829 = vmatpush1.msra.mxu0 0.0
    %830 = vmatprep.subr.mxu0 0.0
    %831 = vmatpush1.msra.mxu0 0.0
    %832 = vmatprep.subr.mxu0 0.0
    %833 = vmatpush1.msra.mxu0 0.0
    %834 = vmatprep.subr.mxu0 0.0
    %835 = vmatpush1.msra.mxu0 0.0
    %836 = vmatprep.subr.mxu0 0.0
    %837 = vmatpush1.msra.mxu0 0.0
    %838 = vmatprep.subr.mxu0 0.0
    %839 = vmatpush1.msra.mxu0 0.0
    %840 = vmatprep.subr.mxu0 0.0
    %841 = vmatpush1.msra.mxu0 0.0
    %842 = vmatprep.subr.mxu0 0.0
    %843 = vmatpush1.msra.mxu0 0.0
    %844 = vmatprep.subr.mxu0 0.0
    %845 = vmatpush1.msra.mxu0 0.0
    %846 = vmatprep.subr.mxu0 0.0
    %847 = vmatpush1.msra.mxu0 0.0
    %848 = vmatprep.subr.mxu0 0.0
    %849 = vmatpush1.msra.mxu0 %v814
    %850 = vmatprep.subr.mxu0 0.0
    %851 = vmatpush1.msra.mxu0 %v813
    %852 = vmatprep.subr.mxu0 0.0
    %853 = vmatpush2.msra.mxu0 0.0
    %854 = vmatprep.subr.mxu0 0.0
    %855 = vmatpush2.msra.mxu0 0.0
    %856 = vmatprep.subr.mxu0 0.0
    %857 = vmatpush2.msra.mxu0 0.0
    %858 = vmatprep.subr.mxu0 0.0
    %859 = vmatpush2.msra.mxu0 0.0
    %860 = vmatprep.subr.mxu0 0.0
    %861 = vmatpush2.msra.mxu0 0.0
    %862 = vmatprep.subr.mxu0 0.0
    %863 = vmatpush2.msra.mxu0 0.0
    %864 = vmatprep.subr.mxu0 0.0
    %865 = vmatpush2.msra.mxu0 0.0
    %866 = vmatprep.subr.mxu0 0.0
    %867 = vmatpush2.msra.mxu0 0.0
    %868 = vmatprep.subr.mxu0 0.0
    %869 = vmatpush2.msra.mxu0 0.0
    %870 = vmatprep.subr.mxu0 0.0
    %871 = vmatpush2.msra.mxu0 0.0
    %872 = vmatprep.subr.mxu0 0.0
    %873 = vmatpush2.msra.mxu0 0.0
    %874 = vmatprep.subr.mxu0 0.0
    %875 = vmatpush2.msra.mxu0 0.0
    %876 = vmatprep.subr.mxu0 0.0
    %877 = vmatpush2.msra.mxu0 0.0
    %878 = vmatprep.subr.mxu0 0.0
    %879 = vmatpush2.msra.mxu0 0.0
    %880 = vmatprep.subr.mxu0 0.0
    %881 = vmatpush2.msra.mxu0 0.0
    %882 = vmatprep.subr.mxu0 0.0
    %883 = vmatpush2.msra.mxu0 0.0
    %884 = vmatprep.mubr.f32.mxu0 0.0
    %885 = vmatmul.mubr.f32.gmra.mxu0 %v818
    %v886 = vpop.f32.mrf.mxu0
    %v887 = vadd.f32 0.0, %v886
    %v888 = vpop.f32.mrf.mxu0
    %889 = vdwg.mxu0
    %v890 = vrot.slane %v571, 7
    %v891 = vsel %vm579, %v890, %v570
    %v892 = vsel %vm63, %v891, 0
    %894 = vmatprep.subr.mxu0 0.0
    %895 = vmatpush1.msra.mxu0 0.0
    %896 = vmatprep.subr.mxu0 0.0
    %897 = vmatpush1.msra.mxu0 0.0
    %898 = vmatprep.subr.mxu0 0.0
    %899 = vmatpush1.msra.mxu0 0.0
    %900 = vmatprep.subr.mxu0 0.0
    %901 = vmatpush1.msra.mxu0 0.0
    %902 = vmatprep.subr.mxu0 0.0
    %903 = vmatpush1.msra.mxu0 0.0
    %904 = vmatprep.subr.mxu0 0.0
    %905 = vmatpush1.msra.mxu0 0.0
    %906 = vmatprep.subr.mxu0 0.0
    %907 = vmatpush1.msra.mxu0 0.0
    %908 = vmatprep.subr.mxu0 0.0
    %909 = vmatpush1.msra.mxu0 0.0
    %910 = vmatprep.subr.mxu0 0.0
    %911 = vmatpush1.msra.mxu0 0.0
    %912 = vmatprep.subr.mxu0 0.0
    %913 = vmatpush1.msra.mxu0 0.0
    %914 = vmatprep.subr.mxu0 0.0
    %915 = vmatpush1.msra.mxu0 0.0
    %916 = vmatprep.subr.mxu0 0.0
    %917 = vmatpush1.msra.mxu0 0.0
    %918 = vmatprep.subr.mxu0 0.0
    %919 = vmatpush1.msra.mxu0 0.0
    %920 = vmatprep.subr.mxu0 0.0
    %921 = vmatpush1.msra.mxu0 0.0
    %922 = vmatprep.subr.mxu0 0.0
    %923 = vmatpush1.msra.mxu0 %v573
    %924 = vmatprep.subr.mxu0 0.0
    %925 = vmatpush1.msra.mxu0 %v572
    %926 = vmatprep.subr.mxu0 0.0
    %927 = vmatpush2.msra.mxu0 0.0
    %928 = vmatprep.subr.mxu0 0.0
    %929 = vmatpush2.msra.mxu0 0.0
    %930 = vmatprep.subr.mxu0 0.0
    %931 = vmatpush2.msra.mxu0 0.0
    %932 = vmatprep.subr.mxu0 0.0
    %933 = vmatpush2.msra.mxu0 0.0
    %934 = vmatprep.subr.mxu0 0.0
    %935 = vmatpush2.msra.mxu0 0.0
    %936 = vmatprep.subr.mxu0 0.0
    %937 = vmatpush2.msra.mxu0 0.0
    %938 = vmatprep.subr.mxu0 0.0
    %939 = vmatpush2.msra.mxu0 0.0
    %940 = vmatprep.subr.mxu0 0.0
    %941 = vmatpush2.msra.mxu0 0.0
    %942 = vmatprep.subr.mxu0 0.0
    %943 = vmatpush2.msra.mxu0 0.0
    %944 = vmatprep.subr.mxu0 0.0
    %945 = vmatpush2.msra.mxu0 0.0
    %946 = vmatprep.subr.mxu0 0.0
    %947 = vmatpush2.msra.mxu0 0.0
    %948 = vmatprep.subr.mxu0 0.0
    %949 = vmatpush2.msra.mxu0 0.0
    %950 = vmatprep.subr.mxu0 0.0
    %951 = vmatpush2.msra.mxu0 0.0
    %952 = vmatprep.subr.mxu0 0.0
    %953 = vmatpush2.msra.mxu0 0.0
    %954 = vmatprep.subr.mxu0 0.0
    %955 = vmatpush2.msra.mxu0 0.0
    %956 = vmatprep.subr.mxu0 0.0
    %957 = vmatpush2.msra.mxu0 0.0
    %958 = vmatprep.mubr.f32.mxu0 0.0
    %959 = vmatmul.mubr.f32.gmra.mxu0 %v892
    %v960 = vpop.f32.mrf.mxu0
    %v961 = vadd.f32 %v650, %v960
    %v962 = vpop.f32.mrf.mxu0
    %963 = vdwg.mxu0
    %v964 = vrot.slane %v570, 2
    %v965 = vrot.slane %v571, 1
    %v966 = vsel %vm579, %v965, %v964
    %v967 = vsel %vm63, %v966, 0
    %969 = vmatprep.subr.mxu0 0.0
    %970 = vmatpush1.msra.mxu0 0.0
    %971 = vmatprep.subr.mxu0 0.0
    %972 = vmatpush1.msra.mxu0 0.0
    %973 = vmatprep.subr.mxu0 0.0
    %974 = vmatpush1.msra.mxu0 0.0
    %975 = vmatprep.subr.mxu0 0.0
    %976 = vmatpush1.msra.mxu0 0.0
    %977 = vmatprep.subr.mxu0 0.0
    %978 = vmatpush1.msra.mxu0 0.0
    %979 = vmatprep.subr.mxu0 0.0
    %980 = vmatpush1.msra.mxu0 0.0
    %981 = vmatprep.subr.mxu0 0.0
    %982 = vmatpush1.msra.mxu0 0.0
    %983 = vmatprep.subr.mxu0 0.0
    %984 = vmatpush1.msra.mxu0 0.0
    %985 = vmatprep.subr.mxu0 0.0
    %986 = vmatpush1.msra.mxu0 0.0
    %987 = vmatprep.subr.mxu0 0.0
    %988 = vmatpush1.msra.mxu0 0.0
    %989 = vmatprep.subr.mxu0 0.0
    %990 = vmatpush1.msra.mxu0 0.0
    %991 = vmatprep.subr.mxu0 0.0
    %992 = vmatpush1.msra.mxu0 0.0
    %993 = vmatprep.subr.mxu0 0.0
    %994 = vmatpush1.msra.mxu0 0.0
    %995 = vmatprep.subr.mxu0 0.0
    %996 = vmatpush1.msra.mxu0 0.0
    %997 = vmatprep.subr.mxu0 0.0
    %998 = vmatpush1.msra.mxu0 %v654
    %999 = vmatprep.subr.mxu0 0.0
    %1000 = vmatpush1.msra.mxu0 %v653
    %1001 = vmatprep.subr.mxu0 0.0
    %1002 = vmatpush2.msra.mxu0 0.0
    %1003 = vmatprep.subr.mxu0 0.0
    %1004 = vmatpush2.msra.mxu0 0.0
    %1005 = vmatprep.subr.mxu0 0.0
    %1006 = vmatpush2.msra.mxu0 0.0
    %1007 = vmatprep.subr.mxu0 0.0
    %1008 = vmatpush2.msra.mxu0 0.0
    %1009 = vmatprep.subr.mxu0 0.0
    %1010 = vmatpush2.msra.mxu0 0.0
    %1011 = vmatprep.subr.mxu0 0.0
    %1012 = vmatpush2.msra.mxu0 0.0
    %1013 = vmatprep.subr.mxu0 0.0
    %1014 = vmatpush2.msra.mxu0 0.0
    %1015 = vmatprep.subr.mxu0 0.0
    %1016 = vmatpush2.msra.mxu0 0.0
    %1017 = vmatprep.subr.mxu0 0.0
    %1018 = vmatpush2.msra.mxu0 0.0
    %1019 = vmatprep.subr.mxu0 0.0
    %1020 = vmatpush2.msra.mxu0 0.0
    %1021 = vmatprep.subr.mxu0 0.0
    %1022 = vmatpush2.msra.mxu0 0.0
    %1023 = vmatprep.subr.mxu0 0.0
    %1024 = vmatpush2.msra.mxu0 0.0
    %1025 = vmatprep.subr.mxu0 0.0
    %1026 = vmatpush2.msra.mxu0 0.0
    %1027 = vmatprep.subr.mxu0 0.0
    %1028 = vmatpush2.msra.mxu0 0.0
    %1029 = vmatprep.subr.mxu0 0.0
    %1030 = vmatpush2.msra.mxu0 0.0
    %1031 = vmatprep.subr.mxu0 0.0
    %1032 = vmatpush2.msra.mxu0 0.0
    %1033 = vmatprep.mubr.f32.mxu0 0.0
    %1034 = vmatmul.mubr.f32.gmra.mxu0 %v967
    %v1035 = vpop.f32.mrf.mxu0
    %v1036 = vadd.f32 %v729, %v1035
    %v1037 = vpop.f32.mrf.mxu0
    %1038 = vdwg.mxu0
    %v1039 = vrot.slane %v570, 4
    %v1040 = vrot.slane %v571, 3
    %v1041 = vsel %vm579, %v1040, %v1039
    %v1042 = vsel %vm63, %v1041, 0
    %1044 = vmatprep.subr.mxu0 0.0
    %1045 = vmatpush1.msra.mxu0 0.0
    %1046 = vmatprep.subr.mxu0 0.0
    %1047 = vmatpush1.msra.mxu0 0.0
    %1048 = vmatprep.subr.mxu0 0.0
    %1049 = vmatpush1.msra.mxu0 0.0
    %1050 = vmatprep.subr.mxu0 0.0
    %1051 = vmatpush1.msra.mxu0 0.0
    %1052 = vmatprep.subr.mxu0 0.0
    %1053 = vmatpush1.msra.mxu0 0.0
    %1054 = vmatprep.subr.mxu0 0.0
    %1055 = vmatpush1.msra.mxu0 0.0
    %1056 = vmatprep.subr.mxu0 0.0
    %1057 = vmatpush1.msra.mxu0 0.0
    %1058 = vmatprep.subr.mxu0 0.0
    %1059 = vmatpush1.msra.mxu0 0.0
    %1060 = vmatprep.subr.mxu0 0.0
    %1061 = vmatpush1.msra.mxu0 0.0
    %1062 = vmatprep.subr.mxu0 0.0
    %1063 = vmatpush1.msra.mxu0 0.0
    %1064 = vmatprep.subr.mxu0 0.0
    %1065 = vmatpush1.msra.mxu0 0.0
    %1066 = vmatprep.subr.mxu0 0.0
    %1067 = vmatpush1.msra.mxu0 0.0
    %1068 = vmatprep.subr.mxu0 0.0
    %1069 = vmatpush1.msra.mxu0 0.0
    %1070 = vmatprep.subr.mxu0 0.0
    %1071 = vmatpush1.msra.mxu0 0.0
    %1072 = vmatprep.subr.mxu0 0.0
    %1073 = vmatpush1.msra.mxu0 %v733
    %1074 = vmatprep.subr.mxu0 0.0
    %1075 = vmatpush1.msra.mxu0 %v732
    %1076 = vmatprep.subr.mxu0 0.0
    %1077 = vmatpush2.msra.mxu0 0.0
    %1078 = vmatprep.subr.mxu0 0.0
    %1079 = vmatpush2.msra.mxu0 0.0
    %1080 = vmatprep.subr.mxu0 0.0
    %1081 = vmatpush2.msra.mxu0 0.0
    %1082 = vmatprep.subr.mxu0 0.0
    %1083 = vmatpush2.msra.mxu0 0.0
    %1084 = vmatprep.subr.mxu0 0.0
    %1085 = vmatpush2.msra.mxu0 0.0
    %1086 = vmatprep.subr.mxu0 0.0
    %1087 = vmatpush2.msra.mxu0 0.0
    %1088 = vmatprep.subr.mxu0 0.0
    %1089 = vmatpush2.msra.mxu0 0.0
    %1090 = vmatprep.subr.mxu0 0.0
    %1091 = vmatpush2.msra.mxu0 0.0
    %1092 = vmatprep.subr.mxu0 0.0
    %1093 = vmatpush2.msra.mxu0 0.0
    %1094 = vmatprep.subr.mxu0 0.0
    %1095 = vmatpush2.msra.mxu0 0.0
    %1096 = vmatprep.subr.mxu0 0.0
    %1097 = vmatpush2.msra.mxu0 0.0
    %1098 = vmatprep.subr.mxu0 0.0
    %1099 = vmatpush2.msra.mxu0 0.0
    %1100 = vmatprep.subr.mxu0 0.0
    %1101 = vmatpush2.msra.mxu0 0.0
    %1102 = vmatprep.subr.mxu0 0.0
    %1103 = vmatpush2.msra.mxu0 0.0
    %1104 = vmatprep.subr.mxu0 0.0
    %1105 = vmatpush2.msra.mxu0 0.0
    %1106 = vmatprep.subr.mxu0 0.0
    %1107 = vmatpush2.msra.mxu0 0.0
    %1108 = vmatprep.mubr.f32.mxu0 0.0
    %1109 = vmatmul.mubr.f32.gmra.mxu0 %v1042
    %v1110 = vpop.f32.mrf.mxu0
    %v1111 = vadd.f32 %v808, %v1110
    %v1112 = vpop.f32.mrf.mxu0
    %1113 = vdwg.mxu0
    %v1114 = vrot.slane %v570, 6
    %v1115 = vrot.slane %v571, 5
    %v1116 = vsel %vm579, %v1115, %v1114
    %v1117 = vsel %vm63, %v1116, 0
    %1119 = vmatprep.subr.mxu0 0.0
    %1120 = vmatpush1.msra.mxu0 0.0
    %1121 = vmatprep.subr.mxu0 0.0
    %1122 = vmatpush1.msra.mxu0 0.0
    %1123 = vmatprep.subr.mxu0 0.0
    %1124 = vmatpush1.msra.mxu0 0.0
    %1125 = vmatprep.subr.mxu0 0.0
    %1126 = vmatpush1.msra.mxu0 0.0
    %1127 = vmatprep.subr.mxu0 0.0
    %1128 = vmatpush1.msra.mxu0 0.0
    %1129 = vmatprep.subr.mxu0 0.0
    %1130 = vmatpush1.msra.mxu0 0.0
    %1131 = vmatprep.subr.mxu0 0.0
    %1132 = vmatpush1.msra.mxu0 0.0
    %1133 = vmatprep.subr.mxu0 0.0
    %1134 = vmatpush1.msra.mxu0 0.0
    %1135 = vmatprep.subr.mxu0 0.0
    %1136 = vmatpush1.msra.mxu0 0.0
    %1137 = vmatprep.subr.mxu0 0.0
    %1138 = vmatpush1.msra.mxu0 0.0
    %1139 = vmatprep.subr.mxu0 0.0
    %1140 = vmatpush1.msra.mxu0 0.0
    %1141 = vmatprep.subr.mxu0 0.0
    %1142 = vmatpush1.msra.mxu0 0.0
    %1143 = vmatprep.subr.mxu0 0.0
    %1144 = vmatpush1.msra.mxu0 0.0
    %1145 = vmatprep.subr.mxu0 0.0
    %1146 = vmatpush1.msra.mxu0 0.0
    %1147 = vmatprep.subr.mxu0 0.0
    %1148 = vmatpush1.msra.mxu0 %v812
    %1149 = vmatprep.subr.mxu0 0.0
    %1150 = vmatpush1.msra.mxu0 %v811
    %1151 = vmatprep.subr.mxu0 0.0
    %1152 = vmatpush2.msra.mxu0 0.0
    %1153 = vmatprep.subr.mxu0 0.0
    %1154 = vmatpush2.msra.mxu0 0.0
    %1155 = vmatprep.subr.mxu0 0.0
    %1156 = vmatpush2.msra.mxu0 0.0
    %1157 = vmatprep.subr.mxu0 0.0
    %1158 = vmatpush2.msra.mxu0 0.0
    %1159 = vmatprep.subr.mxu0 0.0
    %1160 = vmatpush2.msra.mxu0 0.0
    %1161 = vmatprep.subr.mxu0 0.0
    %1162 = vmatpush2.msra.mxu0 0.0
    %1163 = vmatprep.subr.mxu0 0.0
    %1164 = vmatpush2.msra.mxu0 0.0
    %1165 = vmatprep.subr.mxu0 0.0
    %1166 = vmatpush2.msra.mxu0 0.0
    %1167 = vmatprep.subr.mxu0 0.0
    %1168 = vmatpush2.msra.mxu0 0.0
    %1169 = vmatprep.subr.mxu0 0.0
    %1170 = vmatpush2.msra.mxu0 0.0
    %1171 = vmatprep.subr.mxu0 0.0
    %1172 = vmatpush2.msra.mxu0 0.0
    %1173 = vmatprep.subr.mxu0 0.0
    %1174 = vmatpush2.msra.mxu0 0.0
    %1175 = vmatprep.subr.mxu0 0.0
    %1176 = vmatpush2.msra.mxu0 0.0
    %1177 = vmatprep.subr.mxu0 0.0
    %1178 = vmatpush2.msra.mxu0 0.0
    %1179 = vmatprep.subr.mxu0 0.0
    %1180 = vmatpush2.msra.mxu0 0.0
    %1181 = vmatprep.subr.mxu0 0.0
    %1182 = vmatpush2.msra.mxu0 0.0
    %1183 = vmatprep.mubr.f32.mxu0 0.0
    %1184 = vmatmul.mubr.f32.gmra.mxu0 %v1117
    %v1185 = vpop.f32.mrf.mxu0
    %v1186 = vadd.f32 %v887, %v1185
    %v1187 = vpop.f32.mrf.mxu0
    %1188 = vdwg.mxu0
    %v1189 = vadd.f32 %v961, %v1036
    %v1190 = vadd.f32 %v1111, %v1186
    %v1191 = vadd.f32 %v1189, %v1190
    %v1192 = vld [vmem:[#allocation7 + $0x108] sm:$0x1]
    %v1193 = vlaneseq
    %v1194 = vshrl.u32 %v1193, 7
    %v1195 = vsub.s32 0, %v1194
    %v1196 = vrot.slane %v1192, %v1195
    %v1197 = vadd.f32 %v1191, %v1196
    %v1198 = vmax.f32 %v1197, 0.0
    %v1199 = vld [vmem:[#allocation7 + $0x110] sm:$0xff]
    %v1200 = vld [vmem:[#allocation7 + $0x118] sm:$0x1]
    %v1201 = vlaneseq
    %v1202 = vshrl.u32 %v1201, 7
    %v1203 = vsub.s32 0, %v1202
    %v1204 = vrot.slane %v1200, %v1203
    %vm1205 = vcmask 64512
    %v1207 = vsel %vm1205, %v1198, 0
    %1209 = vmatprep.subr.mxu0 0.0
    %1210 = vmatpush1.msra.mxu0 0.0
    %1211 = vmatprep.subr.mxu0 0.0
    %1212 = vmatpush1.msra.mxu0 0.0
    %1213 = vmatprep.subr.mxu0 0.0
    %1214 = vmatpush1.msra.mxu0 0.0
    %1215 = vmatprep.subr.mxu0 0.0
    %1216 = vmatpush1.msra.mxu0 0.0
    %1217 = vmatprep.subr.mxu0 0.0
    %1218 = vmatpush1.msra.mxu0 0.0
    %1219 = vmatprep.subr.mxu0 0.0
    %1220 = vmatpush1.msra.mxu0 0.0
    %1221 = vmatprep.subr.mxu0 0.0
    %1222 = vmatpush1.msra.mxu0 0.0
    %1223 = vmatprep.subr.mxu0 0.0
    %1224 = vmatpush1.msra.mxu0 0.0
    %1225 = vmatprep.subr.mxu0 0.0
    %1226 = vmatpush1.msra.mxu0 0.0
    %1227 = vmatprep.subr.mxu0 0.0
    %1228 = vmatpush1.msra.mxu0 0.0
    %1229 = vmatprep.subr.mxu0 0.0
    %1230 = vmatpush1.msra.mxu0 0.0
    %1231 = vmatprep.subr.mxu0 0.0
    %1232 = vmatpush1.msra.mxu0 0.0
    %1233 = vmatprep.subr.mxu0 0.0
    %1234 = vmatpush1.msra.mxu0 0.0
    %1235 = vmatprep.subr.mxu0 0.0
    %1236 = vmatpush1.msra.mxu0 0.0
    %1237 = vmatprep.subr.mxu0 0.0
    %1238 = vmatpush1.msra.mxu0 0.0
    %1239 = vmatprep.subr.mxu0 0.0
    %1240 = vmatpush1.msra.mxu0 %v1199
    %1241 = vmatprep.subr.mxu0 0.0
    %1242 = vmatpush2.msra.mxu0 0.0
    %1243 = vmatprep.subr.mxu0 0.0
    %1244 = vmatpush2.msra.mxu0 0.0
    %1245 = vmatprep.subr.mxu0 0.0
    %1246 = vmatpush2.msra.mxu0 0.0
    %1247 = vmatprep.subr.mxu0 0.0
    %1248 = vmatpush2.msra.mxu0 0.0
    %1249 = vmatprep.subr.mxu0 0.0
    %1250 = vmatpush2.msra.mxu0 0.0
    %1251 = vmatprep.subr.mxu0 0.0
    %1252 = vmatpush2.msra.mxu0 0.0
    %1253 = vmatprep.subr.mxu0 0.0
    %1254 = vmatpush2.msra.mxu0 0.0
    %1255 = vmatprep.subr.mxu0 0.0
    %1256 = vmatpush2.msra.mxu0 0.0
    %1257 = vmatprep.subr.mxu0 0.0
    %1258 = vmatpush2.msra.mxu0 0.0
    %1259 = vmatprep.subr.mxu0 0.0
    %1260 = vmatpush2.msra.mxu0 0.0
    %1261 = vmatprep.subr.mxu0 0.0
    %1262 = vmatpush2.msra.mxu0 0.0
    %1263 = vmatprep.subr.mxu0 0.0
    %1264 = vmatpush2.msra.mxu0 0.0
    %1265 = vmatprep.subr.mxu0 0.0
    %1266 = vmatpush2.msra.mxu0 0.0
    %1267 = vmatprep.subr.mxu0 0.0
    %1268 = vmatpush2.msra.mxu0 0.0
    %1269 = vmatprep.subr.mxu0 0.0
    %1270 = vmatpush2.msra.mxu0 0.0
    %1271 = vmatprep.subr.mxu0 0.0
    %1272 = vmatpush2.msra.mxu0 0.0
    %1273 = vmatprep.mubr.f32.mxu0 0.0
    %1274 = vmatmul.mubr.f32.gmra.mxu0 %v1207
    %v1275 = vpop.f32.mrf.mxu0
    %v1276 = vadd.f32 %v1204, %v1275
    %v1277 = vpop.f32.mrf.mxu0
    %1278 = vdwg.mxu0
    %v1279 = vxor.u32 %v1276, 2147483648
    %v1280 = vmul.f32 %v1279, 1.442695
    %v1281 = vpow.pop %v1280
    %v1282 = vadd.f32 %v1281, 1.0
    %v1283 = vrcp.pop %v1282
    %v1284 = vmul.f32 1.0, %v1283
    %vm1285 = vcmask 25600
    %1286 = vst.msk [vmem:[#allocation8] sm:$0x3] %vm1285, %v1284
    // Predicated region
    $region26: #{tpu_custom_call.1} parent=1 // pred_check
      _
    $region27: #{tpu_custom_call.1} parent=1 // pred_check_branch
      %1288 = sbr.rel (0) target = $region29
    $region28: #{tpu_custom_call.1} parent=1 // pred_region
      %s1290 = ssub.s32 32, 32
      %1291 = vsyncadd [#allocation4], %s1290
      %s1293 = sshll.u32 [#allocation8], 4
      %s1294 = int_to_ptr.vmem [resolvable:$true] %s1293
      %1296 = dma.vmem_to_hbm [thread:$0]  %s1294, 32, %s3, [#allocation4]
    $region29: #{tpu_custom_call.1} parent=1 // pred_fallthru
      _
    // Predicated region
    $region30: #{tpu_custom_call.1} parent=1 // pred_check
      _
    $region31: #{tpu_custom_call.1} parent=1 // pred_check_branch
      %1298 = sbr.rel (0) target = $region33
    $region32: #{tpu_custom_call.1} parent=1 // pred_region
      %1299 = dma.done [#allocation4], 32
    $region33: #{tpu_custom_call.1} parent=1 // pred_fallthru
      _
    %1300 = vsyncpa [#allocation3], 1
    %1301 = vsyncpa [#allocation6], 1
    %1302 = vsyncpa [#allocation4], 1

</llo_original>
